<compile_context>
chip_gen: v7x
topology: tpu7x:2x2x1
jax: 0.10.0
libtpu: 0.0.40
codegen_flags: <defaults>
</compile_context>

<pallas_src>
import jax
import jax.numpy as jnp
from jax.experimental import pallas as pl
from jax.experimental.pallas import tpu as pltpu


def _round_up(x, m):
    return (x + m - 1) // m * m


def _vmem_limit_bytes():
    # Leave the compiler headroom; fall back gracefully off-TPU / interpret.
    try:
        cap = int(pltpu.get_tpu_info().vmem_capacity_bytes)
    except Exception:
        cap = 64 * 1024 * 1024
    return int(min(cap * 3 // 4, 96 * 1024 * 1024))


# ---------------------------------------------------------------------------
# Kernels
# ---------------------------------------------------------------------------
def _disc_kernel_fused(x_ref, s_ref, w_ref, out_ref):
    """Small-H path: one batch tile per grid step, full weight VMEM-resident.

    x_ref  : (tb, H)  f32   local node representations tile
    s_ref  : (tb, H)  f32   global summary tile
    w_ref  : (H, H)   f32   weight (constant block index => DMA'd once)
    out_ref: (tb, 1)  f32   similarity scores for this batch tile
    """
    h = jnp.dot(s_ref[...], w_ref[...], preferred_element_type=jnp.float32)
    out_ref[...] = jnp.sum(x_ref[...] * h, axis=1, keepdims=True)


def _disc_kernel_tiled(x_ref, s_ref, w_ref, out_ref):
    """Large-H path: grid = (batch tile i, hidden tile j).

    The output block index depends only on i, so the (tb, 1) output block is
    VMEM-resident across the whole j (reduction) axis and doubles as the
    accumulator.  NOTE: correctness of this pattern requires the reduction
    axis j to stay the LAST (innermost) grid axis.

    x_ref  : (tb, tj)     f32
    s_ref  : (tb, H_pad)  f32   resident across j (block index depends on i only)
    w_ref  : (H_pad, tj)  f32   weight column tile
    out_ref: (tb, 1)      f32   accumulator / final scores
    """
    @pl.when(pl.program_id(1) == 0)
    def _init():
        out_ref[...] = jnp.zeros_like(out_ref)

    h = jnp.dot(s_ref[...], w_ref[...], preferred_element_type=jnp.float32)
    out_ref[...] += jnp.sum(x_ref[...] * h, axis=1, keepdims=True)


# ---------------------------------------------------------------------------
# Wrapper
# ---------------------------------------------------------------------------
@jax.jit
def local_global_discriminator(x, summary, weight):
    """scores[b] = sum_j x[b, j] * (summary @ weight)[b, j]  -> shape (B,)."""
    B, H = x.shape
    assert summary.shape == (B, H) and weight.shape == (H, H)
    x = x.astype(jnp.float32)
    summary = summary.astype(jnp.float32)
    weight = weight.astype(jnp.float32)

    # Batch tile: >= 2 tiles whenever B > 128 so the "parallel" axis can be
    # sharded across TensorCores.  For B <= 128 a single full-batch tile is
    # used (a block dim equal to the full array dim is exempt from the (8,128)
    # rule, so no batch padding is needed).
    if B <= 128:
        tb, B_pad = B, B
    else:
        tb = 128 if B <= 512 else 256
        B_pad = _round_up(B, tb)
    nb = B_pad // tb

    small_h = H <= 2048  # full f32 weight (<= 16 MiB) stays VMEM-resident

    if small_h:
        # ---- fast path: no hidden tiling, weight resident, H left unpadded.
        pad_b = B_pad - B
        xp = x if pad_b == 0 else jnp.pad(x, ((0, pad_b), (0, 0)))
        sp = summary if pad_b == 0 else jnp.pad(summary, ((0, pad_b), (0, 0)))

        cost = pl.CostEstimate(
            flops=2 * B_pad * H * H + 2 * B_pad * H,
            transcendentals=0,
            bytes_accessed=(2 * B_pad * H + H * H + B_pad) * 4,
        )
        out = pl.pallas_call(
            _disc_kernel_fused,
            out_shape=jax.ShapeDtypeStruct((B_pad, 1), jnp.float32),
            grid_spec=pltpu.PrefetchScalarGridSpec(
                num_scalar_prefetch=0,
                grid=(nb,),
                in_specs=[
                    pl.BlockSpec((tb, H), lambda i: (i, 0)),   # x tile
                    pl.BlockSpec((tb, H), lambda i: (i, 0)),   # summary tile
                    pl.BlockSpec((H, H), lambda i: (0, 0)),    # weight (resident)
                ],
                out_specs=pl.BlockSpec((tb, 1), lambda i: (i, 0)),
            ),
            compiler_params=pltpu.CompilerParams(
                dimension_semantics=("parallel",),
                vmem_limit_bytes=_vmem_limit_bytes(),
            ),
            cost_estimate=cost,
        )(xp, sp, weight)
    else:
        # ---- large-H path: tile the reduction axis, stream weight columns.
        tj = 256                       # small double-buffered weight slice (v7x-safe)
        H_pad = _round_up(H, tj)
        nj = H_pad // tj

        pad_b, pad_h = B_pad - B, H_pad - H
        need_pad = (pad_b != 0) or (pad_h != 0)
        xp = x if not need_pad else jnp.pad(x, ((0, pad_b), (0, pad_h)))
        sp = summary if not need_pad else jnp.pad(summary, ((0, pad_b), (0, pad_h)))
        wp = weight if pad_h == 0 else jnp.pad(weight, ((0, pad_h), (0, pad_h)))

        cost = pl.CostEstimate(
            flops=2 * B_pad * H_pad * H_pad + 2 * B_pad * H_pad,
            transcendentals=0,
            bytes_accessed=(2 * B_pad * H_pad           # x + summary read once each
                            + nb * H_pad * H_pad        # weight, once per batch tile
                            + B_pad) * 4,
        )
        # Grid order matters: reduction axis j must remain innermost so the
        # output block (block index depends only on i) stays resident over it.
        out = pl.pallas_call(
            _disc_kernel_tiled,
            out_shape=jax.ShapeDtypeStruct((B_pad, 1), jnp.float32),
            grid_spec=pltpu.PrefetchScalarGridSpec(
                num_scalar_prefetch=0,
                grid=(nb, nj),
                in_specs=[
                    pl.BlockSpec((tb, tj), lambda i, j: (i, j)),     # x tile
                    pl.BlockSpec((tb, H_pad), lambda i, j: (i, 0)),  # summary (per-i resident)
                    pl.BlockSpec((H_pad, tj), lambda i, j: (0, j)),  # weight column tile
                ],
                out_specs=pl.BlockSpec((tb, 1), lambda i, j: (i, 0)),
            ),
            compiler_params=pltpu.CompilerParams(
                dimension_semantics=("parallel", "arbitrary"),
                vmem_limit_bytes=_vmem_limit_bytes(),
            ),
            cost_estimate=cost,
        )(xp, sp, wp)

    return out.reshape(B_pad)[:B]


def init_weight(hidden_dim, key):
    """Matches torch_geometric's `uniform(size, tensor)`: U(-1/sqrt(H), 1/sqrt(H))."""
    bound = 1.0 / jnp.sqrt(jnp.float32(hidden_dim))
    return jax.random.uniform(
        key, (hidden_dim, hidden_dim), dtype=jnp.float32, minval=-bound, maxval=bound
    )


if __name__ == "__main__":
    key = jax.random.PRNGKey(0)
    k_x, k_s, k_w = jax.random.split(key, 3)

    batch, hidden_dim = 32, 64
    x = jax.random.normal(k_x, (batch, hidden_dim), dtype=jnp.float32)
    summary = jax.random.normal(k_s, (batch, hidden_dim), dtype=jnp.float32)
    weight = init_weight(hidden_dim, k_w)

    scores = local_global_discriminator(x, summary, weight)
    scores = jax.block_until_ready(scores)
    assert scores.shape == (batch,)

    # Full-f32 reference (same numerics as the PyTorch module).
    ref = jnp.sum(x * (summary @ weight), axis=1)
    max_err = float(jnp.max(jnp.abs(scores - ref)))
    assert jnp.allclose(scores, ref, atol=5e-2, rtol=5e-3), max_err

    print("KERNEL_OK")
</pallas_src>

<mosaic_0001>
module attributes {stable_mosaic.version = 11 : i64} {
  func.func @_disc_kernel_fused(%arg0: i32, %arg1: memref<32x64xf32, #tpu.memory_space<vmem>>, %arg2: memref<32x64xf32, #tpu.memory_space<vmem>>, %arg3: memref<64x64xf32, #tpu.memory_space<vmem>>, %arg4: memref<32x1xf32, #tpu.memory_space<vmem>>) attributes {dimension_semantics = [#tpu.dimension_semantics<parallel>], iteration_bounds = array<i64: 1>, scalar_prefetch = 0 : i64, scratch_operands = 0 : i64, tpu.core_type = #tpu.core_type<tc>, window_params = [{transform_indices = @transform_0, window_bounds = array<i64: 32, 64>}, {transform_indices = @transform_1, window_bounds = array<i64: 32, 64>}, {pipeline_mode = #tpu.pipeline_mode<synchronous>, transform_indices = @transform_2, window_bounds = array<i64: 64, 64>}, {transform_indices = @transform_3, window_bounds = array<i64: 32, 1>}]} {
    %c0 = arith.constant 0 : index
    %c0_0 = arith.constant 0 : index
    %0 = vector.load %arg2[%c0, %c0_0] : memref<32x64xf32, #tpu.memory_space<vmem>>, vector<32x64xf32>
    %c0_1 = arith.constant 0 : index
    %c0_2 = arith.constant 0 : index
    %1 = vector.load %arg3[%c0_1, %c0_2] : memref<64x64xf32, #tpu.memory_space<vmem>>, vector<64x64xf32>
    %cst = arith.constant dense<0.000000e+00> : vector<32x64xf32>
    %2 = tpu.matmul %0, %1, %cst {dimension_numbers = #tpu.dot_dimension_numbers<[1], [0], [0], [1], [0, 0, 1, 1], [], []>} : vector<32x64xf32>, vector<64x64xf32>, vector<32x64xf32> -> vector<32x64xf32>
    %c0_3 = arith.constant 0 : index
    %c0_4 = arith.constant 0 : index
    %3 = vector.load %arg1[%c0_3, %c0_4] : memref<32x64xf32, #tpu.memory_space<vmem>>, vector<32x64xf32>
    %4 = arith.mulf %3, %2 : vector<32x64xf32>
    %cst_5 = arith.constant dense<0.000000e+00> : vector<32xf32>
    %5 = vector.multi_reduction <add>, %4, %cst_5 [1] : vector<32x64xf32> to vector<32xf32>
    %6 = vector.shape_cast %5 : vector<32xf32> to vector<32x1xf32>
    %c0_6 = arith.constant 0 : index
    %c0_7 = arith.constant 0 : index
    %7 = vector.load %arg4[%c0_6, %c0_7] : memref<32x1xf32, #tpu.memory_space<vmem>>, vector<32x1xf32>
    tpu.vector_store %arg4[%c0_6, %c0_7], %6 {strides = array<i32>} : memref<32x1xf32, #tpu.memory_space<vmem>>, vector<32x1xf32>,
    return
  }
  func.func @transform_0(%arg0: i32) -> (i32, i32) {
    %c0_i32 = arith.constant 0 : i32
    %c0_i32_0 = arith.constant 0 : i32
    return %arg0, %c0_i32 : i32, i32
  }
  func.func @transform_1(%arg0: i32) -> (i32, i32) {
    %c0_i32 = arith.constant 0 : i32
    %c0_i32_0 = arith.constant 0 : i32
    return %arg0, %c0_i32 : i32, i32
  }
  func.func @transform_2(%arg0: i32) -> (i32, i32) {
    %c0_i32 = arith.constant 0 : i32
    %c0_i32_0 = arith.constant 0 : i32
    %c0_i32_1 = arith.constant 0 : i32
    return %c0_i32, %c0_i32_0 : i32, i32
  }
  func.func @transform_3(%arg0: i32) -> (i32, i32) {
    %c0_i32 = arith.constant 0 : i32
    %c0_i32_0 = arith.constant 0 : i32
    return %arg0, %c0_i32 : i32, i32
  }
}

</mosaic_0001>

<llo_original>
// kernel: local_global_discriminator.1
$region0: #{local_global_discriminator.1}
  #allocation0 [shape = 'u32[]', space=smem, size = 0x4, offset = 0x4, fixed_abs, tag = 'smem constant byte address 0x4 - core index']
  #allocation1 [shape = 'u32[144,128]{1,0:T(1,128)}', space=vmem, size = 0x12000, scoped, tag = 'internal scratch']
  %s0 = inlined_call_operand.hbm [shape: f32[32,64], index: 0, kind: input, shape index: {}]
  %s1 = inlined_call_operand.hbm [shape: f32[32,64], index: 1, kind: input, shape index: {}]
  %s2 = inlined_call_operand.hbm [shape: f32[64,64], index: 2, kind: input, shape index: {}]
  %s3 = inlined_call_operand.vmem [shape: f32[32,1], index: 3, kind: output, shape index: {}]
  %s4 = sld [smem:[#allocation0]]
  $region34: #{local_global_discriminator.1} parent=0
    _
  %s6 = ssub.s32 1, %s4
  %s7 = scalar_select 0, %s6, %s4
  $region1: #{local_global_discriminator.1} parent=0
    #allocation2 [shape = 'u8[16384]{0}', space=vmem, size = 0x4000, scoped, tag = 'input window, operand 0, single buffered']
    #allocation3 [shape = 's32[1]{0}', space=sflag, size = 0x4, scoped, tag = 'scoped memory for local_global_discriminator.1']
    #allocation4 [shape = 'u8[16384]{0}', space=vmem, size = 0x4000, scoped, tag = 'input window, operand 1, single buffered']
    #allocation5 [shape = 's32[1]{0}', space=sflag, size = 0x4, scoped, tag = 'scoped memory for local_global_discriminator.1']
    #allocation6 [shape = 'u8[32768]{0}', space=vmem, size = 0x8000, scoped, tag = 'input window, operand 2, single buffered']
    %8 = vsyncpa [#allocation3], 0
    %9 = vsyncpa [#allocation5], 0
    // Predicated region
    $region2: #{local_global_discriminator.1} parent=1 // pred_check
      _
    $region3: #{local_global_discriminator.1} parent=1 // pred_check_branch
      %11 = sbr.rel (0) target = $region5
    $region4: #{local_global_discriminator.1} parent=1 // pred_region
      %s13 = ssub.s32 512, 512
      %14 = vsyncadd [#allocation3], %s13
      %s15 = sshll.u32 [#allocation2], 4
      %s16 = int_to_ptr.vmem [resolvable:$true] %s15
      %21 = dma.hbm_to_vmem [thread:$0]  %s0, 512, %s16, [#allocation3], 128, 128, 8
    $region5: #{local_global_discriminator.1} parent=1 // pred_fallthru
      _
    // Predicated region
    $region6: #{local_global_discriminator.1} parent=1 // pred_check
      _
    $region7: #{local_global_discriminator.1} parent=1 // pred_check_branch
      %23 = sbr.rel (0) target = $region9
    $region8: #{local_global_discriminator.1} parent=1 // pred_region
      %s25 = ssub.s32 512, 512
      %26 = vsyncadd [#allocation5], %s25
      %s27 = sshll.u32 [#allocation4], 4
      %s28 = int_to_ptr.vmem [resolvable:$true] %s27
      %33 = dma.hbm_to_vmem [thread:$0]  %s1, 512, %s28, [#allocation5], 128, 128, 8
    $region9: #{local_global_discriminator.1} parent=1 // pred_fallthru
      _
    // Predicated region
    $region10: #{local_global_discriminator.1} parent=1 // pred_check
      _
    $region11: #{local_global_discriminator.1} parent=1 // pred_check_branch
      %35 = sbr.rel (0) target = $region13
    $region12: #{local_global_discriminator.1} parent=1 // pred_region
      %s37 = ssub.s32 1024, 1024
      %38 = vsyncadd [#allocation5], %s37
      %s39 = sshll.u32 [#allocation6], 4
      %s40 = int_to_ptr.vmem [resolvable:$true] %s39
      %45 = dma.hbm_to_vmem [thread:$0]  %s2, 1024, %s40, [#allocation5], 128, 128, 8
    $region13: #{local_global_discriminator.1} parent=1 // pred_fallthru
      _
    // Predicated region
    $region14: #{local_global_discriminator.1} parent=1 // pred_check
      _
    $region15: #{local_global_discriminator.1} parent=1 // pred_check_branch
      %47 = sbr.rel (0) target = $region17
    $region16: #{local_global_discriminator.1} parent=1 // pred_region
      %48 = dma.done [#allocation3], 512
    $region17: #{local_global_discriminator.1} parent=1 // pred_fallthru
      _
    // Predicated region
    $region18: #{local_global_discriminator.1} parent=1 // pred_check
      _
    $region19: #{local_global_discriminator.1} parent=1 // pred_check_branch
      %50 = sbr.rel (0) target = $region21
    $region20: #{local_global_discriminator.1} parent=1 // pred_region
      %51 = dma.done [#allocation5], 512
    $region21: #{local_global_discriminator.1} parent=1 // pred_fallthru
      _
    // Predicated region
    $region22: #{local_global_discriminator.1} parent=1 // pred_check
      _
    $region23: #{local_global_discriminator.1} parent=1 // pred_check_branch
      %53 = sbr.rel (0) target = $region25
    $region24: #{local_global_discriminator.1} parent=1 // pred_region
      %54 = dma.done [#allocation5], 1024
    $region25: #{local_global_discriminator.1} parent=1 // pred_fallthru
      _
    %v55 = vld [vmem:[#allocation4] sm:$0xff]
    %v56 = vld [vmem:[#allocation4 + $0x8] sm:$0xff]
    %v57 = vld [vmem:[#allocation4 + $0x10] sm:$0xff]
    %v58 = vld [vmem:[#allocation4 + $0x18] sm:$0xff]
    %v59 = vld [vmem:[#allocation6] sm:$0xff]
    %v60 = vld [vmem:[#allocation6 + $0x8] sm:$0xff]
    %v61 = vld [vmem:[#allocation6 + $0x10] sm:$0xff]
    %v62 = vld [vmem:[#allocation6 + $0x18] sm:$0xff]
    %v63 = vld [vmem:[#allocation6 + $0x20] sm:$0xff]
    %v64 = vld [vmem:[#allocation6 + $0x28] sm:$0xff]
    %v65 = vld [vmem:[#allocation6 + $0x30] sm:$0xff]
    %v66 = vld [vmem:[#allocation6 + $0x38] sm:$0xff]
    %vm67 = vcmask 523264
    %v69 = vsel %vm67, %v55, 0
    %v72 = vsel %vm67, %v56, 0
    %v75 = vsel %vm67, %v57, 0
    %v78 = vsel %vm67, %v58, 0
    %80 = vmatprep.subr.mxu0 0.0
    %81 = vmatpush1.msra.mxu0 %v59
    %82 = vmatprep.subr.mxu0 0.0
    %83 = vmatpush1.msra.mxu0 %v60
    %84 = vmatprep.subr.mxu0 0.0
    %85 = vmatpush1.msra.mxu0 %v61
    %86 = vmatprep.subr.mxu0 0.0
    %87 = vmatpush1.msra.mxu0 %v62
    %88 = vmatprep.subr.mxu0 0.0
    %89 = vmatpush1.msra.mxu0 %v63
    %90 = vmatprep.subr.mxu0 0.0
    %91 = vmatpush1.msra.mxu0 %v64
    %92 = vmatprep.subr.mxu0 0.0
    %93 = vmatpush1.msra.mxu0 %v65
    %94 = vmatprep.subr.mxu0 0.0
    %95 = vmatpush1.msra.mxu0 %v66
    %96 = vmatprep.subr.mxu0 0.0
    %97 = vmatpush1.msra.mxu0 0.0
    %98 = vmatprep.subr.mxu0 0.0
    %99 = vmatpush1.msra.mxu0 0.0
    %100 = vmatprep.subr.mxu0 0.0
    %101 = vmatpush1.msra.mxu0 0.0
    %102 = vmatprep.subr.mxu0 0.0
    %103 = vmatpush1.msra.mxu0 0.0
    %104 = vmatprep.subr.mxu0 0.0
    %105 = vmatpush1.msra.mxu0 0.0
    %106 = vmatprep.subr.mxu0 0.0
    %107 = vmatpush1.msra.mxu0 0.0
    %108 = vmatprep.subr.mxu0 0.0
    %109 = vmatpush1.msra.mxu0 0.0
    %110 = vmatprep.subr.mxu0 0.0
    %111 = vmatpush1.msra.mxu0 0.0
    %112 = vmatprep.subr.mxu0 0.0
    %113 = vmatpush1.msra.mxu0 0.0
    %114 = vmatprep.subr.mxu0 0.0
    %115 = vmatpush1.msra.mxu0 0.0
    %116 = vmatprep.subr.mxu0 0.0
    %117 = vmatpush1.msra.mxu0 0.0
    %118 = vmatprep.subr.mxu0 0.0
    %119 = vmatpush1.msra.mxu0 0.0
    %120 = vmatprep.subr.mxu0 0.0
    %121 = vmatpush1.msra.mxu0 0.0
    %122 = vmatprep.subr.mxu0 0.0
    %123 = vmatpush1.msra.mxu0 0.0
    %124 = vmatprep.subr.mxu0 0.0
    %125 = vmatpush1.msra.mxu0 0.0
    %126 = vmatprep.subr.mxu0 0.0
    %127 = vmatpush1.msra.mxu0 0.0
    %128 = vmatprep.subr.mxu0 0.0
    %129 = vmatpush1.msra.mxu0 0.0
    %130 = vmatprep.subr.mxu0 0.0
    %131 = vmatpush1.msra.mxu0 0.0
    %132 = vmatprep.subr.mxu0 0.0
    %133 = vmatpush1.msra.mxu0 0.0
    %134 = vmatprep.subr.mxu0 0.0
    %135 = vmatpush1.msra.mxu0 0.0
    %136 = vmatprep.subr.mxu0 0.0
    %137 = vmatpush1.msra.mxu0 0.0
    %138 = vmatprep.subr.mxu0 0.0
    %139 = vmatpush1.msra.mxu0 0.0
    %140 = vmatprep.subr.mxu0 0.0
    %141 = vmatpush1.msra.mxu0 0.0
    %142 = vmatprep.subr.mxu0 0.0
    %143 = vmatpush1.msra.mxu0 0.0
    %144 = vmatprep.mubr.f32.mxu0 0.0
    %145 = vmatmul.mubr.f32.gmra.mrb[0].mxu0 %v69
    %v146 = vpop.f32.mrb[0].mxu0
    %v147 = vadd.f32 0.0, %v146
    %v148 = vpop.f32.mrb[0].mxu0
    %149 = vmatprep.mubr.f32.mxu0 0.0
    %150 = vmatmul.mubr.f32.gmra.mrb[0].mxu0 %v72
    %v151 = vpop.f32.mrb[0].mxu0
    %v152 = vadd.f32 0.0, %v151
    %v153 = vpop.f32.mrb[0].mxu0
    %154 = vmatprep.mubr.f32.mxu0 0.0
    %155 = vmatmul.mubr.f32.gmra.mrb[0].mxu0 %v75
    %v156 = vpop.f32.mrb[0].mxu0
    %v157 = vadd.f32 0.0, %v156
    %v158 = vpop.f32.mrb[0].mxu0
    %159 = vmatprep.mubr.f32.mxu0 0.0
    %160 = vmatmul.mubr.f32.gmra.mrb[0].mxu0 %v78
    %v161 = vpop.f32.mrb[0].mxu0
    %v162 = vadd.f32 0.0, %v161
    %v163 = vpop.f32.mrb[0].mxu0
    %164 = vdwg.mxu0
    %v165 = vld [vmem:[#allocation2] sm:$0xff]
    %v166 = vld [vmem:[#allocation2 + $0x8] sm:$0xff]
    %v167 = vld [vmem:[#allocation2 + $0x10] sm:$0xff]
    %v168 = vld [vmem:[#allocation2 + $0x18] sm:$0xff]
    %v169 = vmul.f32 %v165, %v147
    %v170 = vmul.f32 %v166, %v152
    %v171 = vmul.f32 %v167, %v157
    %v172 = vmul.f32 %v168, %v162
    %v173 = vsel %vm67, %v169, 0.0
    %174 = vadd.xlane.f32.xlu0 %v173
    %v175 = vpop.xlane.xlu0 %174
    %v176 = vsel %vm67, %v170, 0.0
    %177 = vadd.xlane.f32.xlu0 %v176
    %v178 = vpop.xlane.xlu0 %177
    %v179 = vsel %vm67, %v171, 0.0
    %180 = vadd.xlane.f32.xlu0 %v179
    %v181 = vpop.xlane.xlu0 %180
    %v182 = vsel %vm67, %v172, 0.0
    %183 = vadd.xlane.f32.xlu0 %v182
    %v184 = vpop.xlane.xlu0 %183
    %vm185 = vcmask 7168
    %186 = vst.msk [vmem:[%s3] sm:$0xff] %vm185, %v175
    %187 = vst.msk [vmem:[%s3 + $0x8] sm:$0xff] %vm185, %v178
    %188 = vst.msk [vmem:[%s3 + $0x10] sm:$0xff] %vm185, %v181
    %189 = vst.msk [vmem:[%s3 + $0x18] sm:$0xff] %vm185, %v184
    // Predicated region
    $region26: #{local_global_discriminator.1} parent=1 // pred_check
      _
    $region27: #{local_global_discriminator.1} parent=1 // pred_check_branch
      %191 = sbr.rel (0) target = $region29
    $region28: #{local_global_discriminator.1} parent=1 // pred_region
      _
    $region29: #{local_global_discriminator.1} parent=1 // pred_fallthru
      _
    // Predicated region
    $region30: #{local_global_discriminator.1} parent=1 // pred_check
      _
    $region31: #{local_global_discriminator.1} parent=1 // pred_check_branch
      %193 = sbr.rel (0) target = $region33
    $region32: #{local_global_discriminator.1} parent=1 // pred_region
      _
    $region33: #{local_global_discriminator.1} parent=1 // pred_fallthru
      _
    %194 = vsyncpa [#allocation3], 1
    %195 = vsyncpa [#allocation5], 1

</llo_original>
